<compile_context>
chip_gen: v7x
topology: tpu7x:2x2x1
jax: 0.10.0
libtpu: 0.0.40
codegen_flags: <defaults>
</compile_context>

<pallas_src>
import functools
import math

import jax
import jax.numpy as jnp
from jax.experimental import pallas as pl
from jax.experimental.pallas import tpu as pltpu


LANE = 128      # feature dims are zero-padded to multiples of this
SUBLANE = 8     # batch tiles are multiples of this
TB_MAX = 512    # max batch-tile rows (amortizes ~0.35us per grid step)


def _round_up(n, m):
    return ((n + m - 1) // m) * m


def actor_kernel(x_ref, w1_ref, b1_ref, w2_ref, b2_ref, w3_ref, b3_ref,
                 probs_ref, *, out_size):
    # in-kernel cast of the activation tile (f32 DMA'd, bf16 into the MXU)
    x = x_ref[...].astype(jnp.bfloat16)
    # fc_in + ReLU   (bf16 MXU matmul, f32 accumulation, f32 elementwise)
    h1 = jnp.dot(x, w1_ref[...], preferred_element_type=jnp.float32)
    h1 = jnp.maximum(h1 + b1_ref[...], 0.0)
    # fc_h1 + ReLU
    h2 = jnp.dot(h1.astype(jnp.bfloat16), w2_ref[...],
                 preferred_element_type=jnp.float32)
    h2 = jnp.maximum(h2 + b2_ref[...], 0.0)
    # fc_out; b3's padded lanes are -inf (baked in at init), so padded logits
    # are exactly -inf and contribute exactly 0 to the softmax denominator.
    logits = jnp.dot(h2.astype(jnp.bfloat16), w3_ref[...],
                     preferred_element_type=jnp.float32)
    logits = logits + b3_ref[...]
    # numerically stable softmax over the last axis (exact normalization)
    m = jnp.max(logits, axis=-1, keepdims=True)
    e = jnp.exp(logits - m)
    denom = jnp.sum(e, axis=-1, keepdims=True)
    probs = e / denom
    # narrow store: only the real output lanes go back to HBM
    probs_ref[...] = probs[:, :out_size]


def _choose_tile(B):
    """Batch-tile rows: single tile for small batches (latency path); large
    tiles but >= 2 grid steps for big batches (keeps both v7x TCs busy)."""
    if B <= 2 * LANE:
        return _round_up(B, SUBLANE)
    return min(TB_MAX, _round_up(pl.cdiv(B, 2), LANE))


@functools.partial(jax.jit, static_argnums=(2,))
def _actor_forward_impl(x, params, out_size):
    w1, b1, w2, b2, w3, b3 = params
    B, in_size = x.shape

    tb = _choose_tile(B)
    b_pad = _round_up(B, tb)
    if b_pad != B:
        x = jnp.pad(x, ((0, b_pad - B), (0, 0)))

    grid = (b_pad // tb,)
    kernel = functools.partial(actor_kernel, out_size=out_size)

    # constant block index -> weights/biases loaded once, stay VMEM-resident
    const = lambda shape: pl.BlockSpec(shape, lambda i: (0,) * len(shape))

    probs = pl.pallas_call(
        kernel,
        out_shape=jax.ShapeDtypeStruct((b_pad, out_size), jnp.float32),
        grid=grid,
        in_specs=[
            pl.BlockSpec((tb, in_size), lambda i: (i, 0)),
            const(w1.shape), const(b1.shape),
            const(w2.shape), const(b2.shape),
            const(w3.shape), const(b3.shape),
        ],
        out_specs=pl.BlockSpec((tb, out_size), lambda i: (i, 0)),
        compiler_params=pltpu.CompilerParams(
            dimension_semantics=("parallel",)),
    )(x, w1, b1, w2, b2, w3, b3)

    if b_pad != B:
        probs = probs[:B]
    if B == 1:
        probs = probs[0]   # mirrors torch's x.squeeze(0)
    return probs


def actor_forward(x, params, out_size):
    """x: (B, input_size) float32. Returns the Categorical probabilities (the
    distribution's parameters); leading batch dim squeezed when B == 1."""
    return _actor_forward_impl(x, params, out_size)


def init_linear(key, fan_in, fan_out, fan_in_pad, fan_out_pad, bias_pad_value=0.0):
    """nn.Linear default init U(-1/sqrt(fan_in), 1/sqrt(fan_in)); weight stored
    as (in, out) (transpose of torch layout), zero-padded to lane-dense shapes.
    Weights in bf16, biases in f32; the bias pad value is configurable so the
    output layer can bake the softmax -inf mask into its padded lanes."""
    kw, kb = jax.random.split(key)
    bound = 1.0 / math.sqrt(fan_in)
    w = jax.random.uniform(kw, (fan_in, fan_out), jnp.float32, -bound, bound)
    b = jax.random.uniform(kb, (1, fan_out), jnp.float32, -bound, bound)
    w = jnp.pad(w, ((0, fan_in_pad - fan_in), (0, fan_out_pad - fan_out)))
    b = jnp.pad(b, ((0, 0), (0, fan_out_pad - fan_out)),
                constant_values=bias_pad_value)
    return w.astype(jnp.bfloat16), b


def make_actor_params(seed, input_size, hidden1_size, hidden2_size, output_size):
    h1p = _round_up(hidden1_size, LANE)
    h2p = _round_up(hidden2_size, LANE)
    op = _round_up(output_size, LANE)
    key = jax.random.PRNGKey(seed)
    k1, k2, k3 = jax.random.split(key, 3)
    w1, b1 = init_linear(k1, input_size, hidden1_size, input_size, h1p)
    w2, b2 = init_linear(k2, hidden1_size, hidden2_size, h1p, h2p)
    # w3's padded columns are exactly zero, so -inf padded bias lanes make the
    # padded logits exactly -inf (exp -> exactly 0): no in-kernel mask needed.
    w3, b3 = init_linear(k3, hidden2_size, output_size, h2p, op,
                         bias_pad_value=-jnp.inf)
    return (w1, b1, w2, b2, w3, b3)


def actor_reference(x, params, out_size):
    """Plain-JAX reference mirroring the kernel's bf16 rounding."""
    w1, b1, w2, b2, w3, b3 = params
    f32 = lambda a: a.astype(jnp.float32)
    bf = lambda a: a.astype(jnp.bfloat16).astype(jnp.float32)
    h1 = jnp.maximum(bf(x) @ f32(w1) + b1, 0.0)
    h2 = jnp.maximum(bf(h1) @ f32(w2) + b2, 0.0)
    logits = (bf(h2) @ f32(w3) + b3)[:, :out_size]
    return jax.nn.softmax(logits, axis=-1)


if __name__ == "__main__":
    # Logical sizes consistent with the module; feature dims padded to 128.
    input_size, hidden1_size, hidden2_size, output_size = 16, 32, 32, 8
    seed = 0
    params = make_actor_params(seed, input_size, hidden1_size, hidden2_size,
                               output_size)

    key = jax.random.PRNGKey(0)
    k_small, k_large = jax.random.split(key)

    # Small batched forward.
    xb = jax.random.normal(k_small, (4, input_size), jnp.float32)
    probs = jax.block_until_ready(actor_forward(xb, params, output_size))
    ref = actor_reference(xb, params, output_size)
    assert probs.shape == (4, output_size), probs.shape
    assert jnp.allclose(probs, ref, atol=2e-3, rtol=2e-3), float(
        jnp.max(jnp.abs(probs - ref)))
    assert jnp.allclose(jnp.sum(probs, axis=-1), 1.0, atol=1e-4)

    # Single-state path (mirrors the torch module's x.squeeze(0)).
    p1 = jax.block_until_ready(actor_forward(xb[:1], params, output_size))
    assert p1.shape == (output_size,), p1.shape
    assert jnp.allclose(p1, ref[0], atol=2e-3, rtol=2e-3)
    assert jnp.allclose(jnp.sum(p1), 1.0, atol=1e-4)

    # Larger batch: exercises the multi-step "parallel" grid (>= 2 tiles so
    # both TensorCores are used on v7x) and the batch-padding path.
    xl = jax.random.normal(k_large, (272, input_size), jnp.float32)
    probs_l = jax.block_until_ready(actor_forward(xl, params, output_size))
    ref_l = actor_reference(xl, params, output_size)
    assert probs_l.shape == (272, output_size), probs_l.shape
    assert jnp.allclose(probs_l, ref_l, atol=2e-3, rtol=2e-3), float(
        jnp.max(jnp.abs(probs_l - ref_l)))
    assert jnp.allclose(jnp.sum(probs_l, axis=-1), 1.0, atol=1e-4)

    # TODO(synk): torch.distributions.Categorical object construction has no
    # Pallas equivalent; the kernel returns the distribution's probabilities.
    print("KERNEL_OK")
</pallas_src>

<mosaic_0001>
module attributes {stable_mosaic.version = 11 : i64} {
  func.func @actor_kernel(%arg0: i32, %arg1: memref<8x16xf32, #tpu.memory_space<vmem>>, %arg2: memref<16x128xbf16, #tpu.memory_space<vmem>>, %arg3: memref<1x128xf32, #tpu.memory_space<vmem>>, %arg4: memref<128x128xbf16, #tpu.memory_space<vmem>>, %arg5: memref<1x128xf32, #tpu.memory_space<vmem>>, %arg6: memref<128x128xbf16, #tpu.memory_space<vmem>>, %arg7: memref<1x128xf32, #tpu.memory_space<vmem>>, %arg8: memref<8x8xf32, #tpu.memory_space<vmem>>) attributes {dimension_semantics = [#tpu.dimension_semantics<parallel>], iteration_bounds = array<i64: 1>, scalar_prefetch = 0 : i64, scratch_operands = 0 : i64, tpu.core_type = #tpu.core_type<tc>, window_params = [{transform_indices = @transform_0, window_bounds = array<i64: 8, 16>}, {pipeline_mode = #tpu.pipeline_mode<synchronous>, transform_indices = @transform_1, window_bounds = array<i64: 16, 128>}, {pipeline_mode = #tpu.pipeline_mode<synchronous>, transform_indices = @transform_2, window_bounds = array<i64: 1, 128>}, {pipeline_mode = #tpu.pipeline_mode<synchronous>, transform_indices = @transform_3, window_bounds = array<i64: 128, 128>}, {pipeline_mode = #tpu.pipeline_mode<synchronous>, transform_indices = @transform_4, window_bounds = array<i64: 1, 128>}, {pipeline_mode = #tpu.pipeline_mode<synchronous>, transform_indices = @transform_5, window_bounds = array<i64: 128, 128>}, {pipeline_mode = #tpu.pipeline_mode<synchronous>, transform_indices = @transform_6, window_bounds = array<i64: 1, 128>}, {transform_indices = @transform_7, window_bounds = array<i64: 8, 8>}]} {
    %c0 = arith.constant 0 : index
    %c0_0 = arith.constant 0 : index
    %0 = vector.load %arg1[%c0, %c0_0] : memref<8x16xf32, #tpu.memory_space<vmem>>, vector<8x16xf32>
    %1 = arith.truncf %0 : vector<8x16xf32> to vector<8x16xbf16>
    %c0_1 = arith.constant 0 : index
    %c0_2 = arith.constant 0 : index
    %2 = vector.load %arg2[%c0_1, %c0_2] : memref<16x128xbf16, #tpu.memory_space<vmem>>, vector<16x128xbf16>
    %cst = arith.constant dense<0.000000e+00> : vector<8x128xf32>
    %3 = tpu.matmul %1, %2, %cst {dimension_numbers = #tpu.dot_dimension_numbers<[1], [0], [0], [1], [0, 0, 1, 1], [], []>} : vector<8x16xbf16>, vector<16x128xbf16>, vector<8x128xf32> -> vector<8x128xf32>
    %c0_3 = arith.constant 0 : index
    %c0_4 = arith.constant 0 : index
    %4 = vector.load %arg3[%c0_3, %c0_4] : memref<1x128xf32, #tpu.memory_space<vmem>>, vector<1x128xf32>
    %5 = vector.broadcast %4 : vector<1x128xf32> to vector<8x128xf32>
    %6 = arith.addf %3, %5 : vector<8x128xf32>
    %cst_5 = arith.constant 0.000000e+00 : f32
    %7 = vector.broadcast %cst_5 : f32 to vector<8x128xf32>
    %8 = arith.maximumf %6, %7 : vector<8x128xf32>
    %9 = arith.truncf %8 : vector<8x128xf32> to vector<8x128xbf16>
    %c0_6 = arith.constant 0 : index
    %c0_7 = arith.constant 0 : index
    %10 = vector.load %arg4[%c0_6, %c0_7] : memref<128x128xbf16, #tpu.memory_space<vmem>>, vector<128x128xbf16>
    %cst_8 = arith.constant dense<0.000000e+00> : vector<8x128xf32>
    %11 = tpu.matmul %9, %10, %cst_8 {dimension_numbers = #tpu.dot_dimension_numbers<[1], [0], [0], [1], [0, 0, 1, 1], [], []>} : vector<8x128xbf16>, vector<128x128xbf16>, vector<8x128xf32> -> vector<8x128xf32>
    %c0_9 = arith.constant 0 : index
    %c0_10 = arith.constant 0 : index
    %12 = vector.load %arg5[%c0_9, %c0_10] : memref<1x128xf32, #tpu.memory_space<vmem>>, vector<1x128xf32>
    %13 = vector.broadcast %12 : vector<1x128xf32> to vector<8x128xf32>
    %14 = arith.addf %11, %13 : vector<8x128xf32>
    %cst_11 = arith.constant 0.000000e+00 : f32
    %15 = vector.broadcast %cst_11 : f32 to vector<8x128xf32>
    %16 = arith.maximumf %14, %15 : vector<8x128xf32>
    %17 = arith.truncf %16 : vector<8x128xf32> to vector<8x128xbf16>
    %c0_12 = arith.constant 0 : index
    %c0_13 = arith.constant 0 : index
    %18 = vector.load %arg6[%c0_12, %c0_13] : memref<128x128xbf16, #tpu.memory_space<vmem>>, vector<128x128xbf16>
    %cst_14 = arith.constant dense<0.000000e+00> : vector<8x128xf32>
    %19 = tpu.matmul %17, %18, %cst_14 {dimension_numbers = #tpu.dot_dimension_numbers<[1], [0], [0], [1], [0, 0, 1, 1], [], []>} : vector<8x128xbf16>, vector<128x128xbf16>, vector<8x128xf32> -> vector<8x128xf32>
    %c0_15 = arith.constant 0 : index
    %c0_16 = arith.constant 0 : index
    %20 = vector.load %arg7[%c0_15, %c0_16] : memref<1x128xf32, #tpu.memory_space<vmem>>, vector<1x128xf32>
    %21 = vector.broadcast %20 : vector<1x128xf32> to vector<8x128xf32>
    %22 = arith.addf %19, %21 : vector<8x128xf32>
    %cst_17 = arith.constant dense<0xFF800000> : vector<8xf32>
    %23 = vector.multi_reduction <maximumf>, %22, %cst_17 [1] : vector<8x128xf32> to vector<8xf32>
    %24 = vector.shape_cast %23 : vector<8xf32> to vector<8x1xf32>
    %25 = vector.broadcast %24 : vector<8x1xf32> to vector<8x128xf32>
    %26 = arith.subf %22, %25 : vector<8x128xf32>
    %27 = math.exp %26 : vector<8x128xf32>
    %cst_18 = arith.constant dense<0.000000e+00> : vector<8xf32>
    %28 = vector.multi_reduction <add>, %27, %cst_18 [1] : vector<8x128xf32> to vector<8xf32>
    %29 = vector.shape_cast %28 : vector<8xf32> to vector<8x1xf32>
    %30 = vector.broadcast %29 : vector<8x1xf32> to vector<8x128xf32>
    %31 = arith.divf %27, %30 : vector<8x128xf32>
    %32 = vector.extract_strided_slice %31 {offsets = [0, 0], sizes = [8, 8], strides = [1, 1]} : vector<8x128xf32> to vector<8x8xf32>
    %c0_19 = arith.constant 0 : index
    %c0_20 = arith.constant 0 : index
    %33 = vector.load %arg8[%c0_19, %c0_20] : memref<8x8xf32, #tpu.memory_space<vmem>>, vector<8x8xf32>
    tpu.vector_store %arg8[%c0_19, %c0_20], %32 {strides = array<i32>} : memref<8x8xf32, #tpu.memory_space<vmem>>, vector<8x8xf32>,
    return
  }
  func.func @transform_0(%arg0: i32) -> (i32, i32) {
    %c0_i32 = arith.constant 0 : i32
    %c0_i32_0 = arith.constant 0 : i32
    return %arg0, %c0_i32 : i32, i32
  }
  func.func @transform_1(%arg0: i32) -> (i32, i32) {
    %c0_i32 = arith.constant 0 : i32
    %c0_i32_0 = arith.constant 0 : i32
    %c0_i32_1 = arith.constant 0 : i32
    return %c0_i32, %c0_i32_0 : i32, i32
  }
  func.func @transform_2(%arg0: i32) -> (i32, i32) {
    %c0_i32 = arith.constant 0 : i32
    %c0_i32_0 = arith.constant 0 : i32
    %c0_i32_1 = arith.constant 0 : i32
    return %c0_i32, %c0_i32_0 : i32, i32
  }
  func.func @transform_3(%arg0: i32) -> (i32, i32) {
    %c0_i32 = arith.constant 0 : i32
    %c0_i32_0 = arith.constant 0 : i32
    %c0_i32_1 = arith.constant 0 : i32
    return %c0_i32, %c0_i32_0 : i32, i32
  }
  func.func @transform_4(%arg0: i32) -> (i32, i32) {
    %c0_i32 = arith.constant 0 : i32
    %c0_i32_0 = arith.constant 0 : i32
    %c0_i32_1 = arith.constant 0 : i32
    return %c0_i32, %c0_i32_0 : i32, i32
  }
  func.func @transform_5(%arg0: i32) -> (i32, i32) {
    %c0_i32 = arith.constant 0 : i32
    %c0_i32_0 = arith.constant 0 : i32
    %c0_i32_1 = arith.constant 0 : i32
    return %c0_i32, %c0_i32_0 : i32, i32
  }
  func.func @transform_6(%arg0: i32) -> (i32, i32) {
    %c0_i32 = arith.constant 0 : i32
    %c0_i32_0 = arith.constant 0 : i32
    %c0_i32_1 = arith.constant 0 : i32
    return %c0_i32, %c0_i32_0 : i32, i32
  }
  func.func @transform_7(%arg0: i32) -> (i32, i32) {
    %c0_i32 = arith.constant 0 : i32
    %c0_i32_0 = arith.constant 0 : i32
    return %arg0, %c0_i32 : i32, i32
  }
}

</mosaic_0001>

<llo_original>
// kernel: _actor_forward_impl.1
$region0: #{_actor_forward_impl.1}
  #allocation0 [shape = 'u32[]', space=smem, size = 0x4, offset = 0x4, fixed_abs, tag = 'smem constant byte address 0x4 - core index']
  #allocation1 [shape = 'u32[144,128]{1,0:T(1,128)}', space=vmem, size = 0x12000, scoped, tag = 'internal scratch']
  %s0 = inlined_call_operand.vmem [shape: f32[8,16], index: 0, kind: input, shape index: {}]
  %s1 = inlined_call_operand.vmem [shape: bf16[16,128], index: 1, kind: input, shape index: {}]
  %s2 = inlined_call_operand.vmem [shape: f32[1,128], index: 2, kind: input, shape index: {}]
  %s3 = inlined_call_operand.hbm [shape: bf16[128,128], index: 3, kind: input, shape index: {}]
  %s4 = inlined_call_operand.vmem [shape: f32[1,128], index: 4, kind: input, shape index: {}]
  %s5 = inlined_call_operand.hbm [shape: bf16[128,128], index: 5, kind: input, shape index: {}]
  %s6 = inlined_call_operand.vmem [shape: f32[1,128], index: 6, kind: input, shape index: {}]
  %s7 = inlined_call_operand.vmem [shape: f32[8,8], index: 7, kind: output, shape index: {}]
  %s8 = sld [smem:[#allocation0]]
  $region46: #{_actor_forward_impl.1} parent=0
    _
  %s10 = ssub.s32 1, %s8
  %s11 = scalar_select 0, %s10, %s8
  $region1: #{_actor_forward_impl.1} parent=0
    #allocation2 [shape = 'u8[32768]{0}', space=vmem, size = 0x8000, scoped, tag = 'input window, operand 3, single buffered']
    #allocation3 [shape = 's32[1]{0}', space=sflag, size = 0x4, scoped, tag = 'scoped memory for _actor_forward_impl.1']
    #allocation4 [shape = 'u8[32768]{0}', space=vmem, size = 0x8000, scoped, tag = 'input window, operand 5, single buffered']
    #allocation5 [shape = 's32[1]{0}', space=sflag, size = 0x4, scoped, tag = 'scoped memory for _actor_forward_impl.1']
    %12 = vsyncpa [#allocation3], 0
    %13 = vsyncpa [#allocation5], 0
    // Predicated region
    $region2: #{_actor_forward_impl.1} parent=1 // pred_check
      _
    $region3: #{_actor_forward_impl.1} parent=1 // pred_check_branch
      %15 = sbr.rel (0) target = $region5
    $region4: #{_actor_forward_impl.1} parent=1 // pred_region
      _
    $region5: #{_actor_forward_impl.1} parent=1 // pred_fallthru
      _
    // Predicated region
    $region6: #{_actor_forward_impl.1} parent=1 // pred_check
      _
    $region7: #{_actor_forward_impl.1} parent=1 // pred_check_branch
      %17 = sbr.rel (0) target = $region9
    $region8: #{_actor_forward_impl.1} parent=1 // pred_region
      _
    $region9: #{_actor_forward_impl.1} parent=1 // pred_fallthru
      _
    // Predicated region
    $region10: #{_actor_forward_impl.1} parent=1 // pred_check
      _
    $region11: #{_actor_forward_impl.1} parent=1 // pred_check_branch
      %19 = sbr.rel (0) target = $region13
    $region12: #{_actor_forward_impl.1} parent=1 // pred_region
      _
    $region13: #{_actor_forward_impl.1} parent=1 // pred_fallthru
      _
    // Predicated region
    $region14: #{_actor_forward_impl.1} parent=1 // pred_check
      _
    $region15: #{_actor_forward_impl.1} parent=1 // pred_check_branch
      %21 = sbr.rel (0) target = $region17
    $region16: #{_actor_forward_impl.1} parent=1 // pred_region
      %s23 = ssub.s32 1024, 1024
      %24 = vsyncadd [#allocation3], %s23
      %s25 = sshll.u32 [#allocation2], 4
      %s26 = int_to_ptr.vmem [resolvable:$true] %s25
      %31 = dma.hbm_to_vmem [thread:$0]  %s3, 1024, %s26, [#allocation3], 64, 64, 4
    $region17: #{_actor_forward_impl.1} parent=1 // pred_fallthru
      _
    // Predicated region
    $region18: #{_actor_forward_impl.1} parent=1 // pred_check
      _
    $region19: #{_actor_forward_impl.1} parent=1 // pred_check_branch
      %33 = sbr.rel (0) target = $region21
    $region20: #{_actor_forward_impl.1} parent=1 // pred_region
      _
    $region21: #{_actor_forward_impl.1} parent=1 // pred_fallthru
      _
    // Predicated region
    $region22: #{_actor_forward_impl.1} parent=1 // pred_check
      _
    $region23: #{_actor_forward_impl.1} parent=1 // pred_check_branch
      %35 = sbr.rel (0) target = $region25
    $region24: #{_actor_forward_impl.1} parent=1 // pred_region
      %s37 = ssub.s32 1024, 1024
      %38 = vsyncadd [#allocation5], %s37
      %s39 = sshll.u32 [#allocation4], 4
      %s40 = int_to_ptr.vmem [resolvable:$true] %s39
      %45 = dma.hbm_to_vmem [thread:$0]  %s5, 1024, %s40, [#allocation5], 64, 64, 4
    $region25: #{_actor_forward_impl.1} parent=1 // pred_fallthru
      _
    // Predicated region
    $region26: #{_actor_forward_impl.1} parent=1 // pred_check
      _
    $region27: #{_actor_forward_impl.1} parent=1 // pred_check_branch
      %47 = sbr.rel (0) target = $region29
    $region28: #{_actor_forward_impl.1} parent=1 // pred_region
      _
    $region29: #{_actor_forward_impl.1} parent=1 // pred_fallthru
      _
    // Predicated region
    $region30: #{_actor_forward_impl.1} parent=1 // pred_check
      _
    $region31: #{_actor_forward_impl.1} parent=1 // pred_check_branch
      %49 = sbr.rel (0) target = $region33
    $region32: #{_actor_forward_impl.1} parent=1 // pred_region
      %50 = dma.done [#allocation3], 1024
    $region33: #{_actor_forward_impl.1} parent=1 // pred_fallthru
      _
    // Predicated region
    $region34: #{_actor_forward_impl.1} parent=1 // pred_check
      _
    $region35: #{_actor_forward_impl.1} parent=1 // pred_check_branch
      %52 = sbr.rel (0) target = $region37
    $region36: #{_actor_forward_impl.1} parent=1 // pred_region
      %53 = dma.done [#allocation5], 1024
    $region37: #{_actor_forward_impl.1} parent=1 // pred_fallthru
      _
    %v55 = vld [vmem:[%s0] sm:$0xff]
    %v56 = vpack.c.bf16 %v55, %v55
    %v57 = vld [vmem:[%s1] sm:$0xf]
    %v58 = vld [vmem:[%s1 + $0x4] sm:$0xf]
    %v59 = vld [vmem:[%s2] sm:$0x1]
    %v61 = vlaneseq
    %v62 = vshrl.u32 %v61, 7
    %v63 = vsub.s32 0, %v62
    %v64 = vrot.slane %v59, %v63
    %v68 = vunpack.c.l.b16 %v57
    %v69 = vunpack.c.l.b16 %v58
    %v70 = vpack.c.b16 %v69, %v68
    %vm72 = vcmask 130048
    %v74 = vsel %vm72, %v56, 0
    %76 = vmatprep.subr.bf16.mxu0 0
    %77 = vmatpush1.bf16.msra.mxu0 %v70
    %78 = vmatprep.subr.bf16.mxu0 0
    %79 = vmatpush1.bf16.msra.mxu0 0
    %80 = vmatprep.subr.bf16.mxu0 0
    %81 = vmatpush1.bf16.msra.mxu0 0
    %82 = vmatprep.subr.bf16.mxu0 0
    %83 = vmatpush1.bf16.msra.mxu0 0
    %84 = vmatprep.subr.bf16.mxu0 0
    %85 = vmatpush1.bf16.msra.mxu0 0
    %86 = vmatprep.subr.bf16.mxu0 0
    %87 = vmatpush1.bf16.msra.mxu0 0
    %88 = vmatprep.subr.bf16.mxu0 0
    %89 = vmatpush1.bf16.msra.mxu0 0
    %90 = vmatprep.subr.bf16.mxu0 0
    %91 = vmatpush1.bf16.msra.mxu0 0
    %92 = vmatprep.subr.bf16.mxu0 0
    %93 = vmatpush1.bf16.msra.mxu0 0
    %94 = vmatprep.subr.bf16.mxu0 0
    %95 = vmatpush1.bf16.msra.mxu0 0
    %96 = vmatprep.subr.bf16.mxu0 0
    %97 = vmatpush1.bf16.msra.mxu0 0
    %98 = vmatprep.subr.bf16.mxu0 0
    %99 = vmatpush1.bf16.msra.mxu0 0
    %100 = vmatprep.subr.bf16.mxu0 0
    %101 = vmatpush1.bf16.msra.mxu0 0
    %102 = vmatprep.subr.bf16.mxu0 0
    %103 = vmatpush1.bf16.msra.mxu0 0
    %104 = vmatprep.subr.bf16.mxu0 0
    %105 = vmatpush1.bf16.msra.mxu0 0
    %106 = vmatprep.subr.bf16.mxu0 0
    %107 = vmatpush1.bf16.msra.mxu0 0
    %108 = vmatprep.mubr.bf16.mxu0 0
    %109 = vmatmul.mubr.bf16.gmra.mrb[0].mxu0 %v74
    %v110 = vpop.f32.mrb[0].mxu0
    %v111 = vadd.f32 %v64, %v110
    %v112 = vpop.f32.mrb[0].mxu0
    %v113 = vpop.f32.mrb[0].mxu0
    %v114 = vpop.f32.mrb[0].mxu0
    %115 = vdwg.mxu0
    %v116 = vmax.f32 %v111, 0.0
    %v117 = vpack.c.bf16 %v116, %v116
    %v118 = vld [vmem:[#allocation2] sm:$0xf]
    %v119 = vld [vmem:[#allocation2 + $0x4] sm:$0xf]
    %v120 = vld [vmem:[#allocation2 + $0x8] sm:$0xf]
    %v121 = vld [vmem:[#allocation2 + $0xc] sm:$0xf]
    %v122 = vld [vmem:[#allocation2 + $0x10] sm:$0xf]
    %v123 = vld [vmem:[#allocation2 + $0x14] sm:$0xf]
    %v124 = vld [vmem:[#allocation2 + $0x18] sm:$0xf]
    %v125 = vld [vmem:[#allocation2 + $0x1c] sm:$0xf]
    %v126 = vld [vmem:[#allocation2 + $0x20] sm:$0xf]
    %v127 = vld [vmem:[#allocation2 + $0x24] sm:$0xf]
    %v128 = vld [vmem:[#allocation2 + $0x28] sm:$0xf]
    %v129 = vld [vmem:[#allocation2 + $0x2c] sm:$0xf]
    %v130 = vld [vmem:[#allocation2 + $0x30] sm:$0xf]
    %v131 = vld [vmem:[#allocation2 + $0x34] sm:$0xf]
    %v132 = vld [vmem:[#allocation2 + $0x38] sm:$0xf]
    %v133 = vld [vmem:[#allocation2 + $0x3c] sm:$0xf]
    %v134 = vld [vmem:[%s4] sm:$0x1]
    %v136 = vlaneseq
    %v137 = vshrl.u32 %v136, 7
    %v138 = vsub.s32 0, %v137
    %v139 = vrot.slane %v134, %v138
    %v157 = vunpack.c.l.b16 %v118
    %v158 = vunpack.c.l.b16 %v119
    %v159 = vunpack.c.l.b16 %v120
    %v160 = vunpack.c.l.b16 %v121
    %v161 = vunpack.c.l.b16 %v122
    %v162 = vunpack.c.l.b16 %v123
    %v163 = vunpack.c.l.b16 %v124
    %v164 = vunpack.c.l.b16 %v125
    %v165 = vunpack.c.l.b16 %v126
    %v166 = vunpack.c.l.b16 %v127
    %v167 = vunpack.c.l.b16 %v128
    %v168 = vunpack.c.l.b16 %v129
    %v169 = vunpack.c.l.b16 %v130
    %v170 = vunpack.c.l.b16 %v131
    %v171 = vunpack.c.l.b16 %v132
    %v172 = vunpack.c.l.b16 %v133
    %v173 = vpack.c.b16 %v158, %v157
    %v174 = vpack.c.b16 %v160, %v159
    %v175 = vpack.c.b16 %v162, %v161
    %v176 = vpack.c.b16 %v164, %v163
    %v177 = vpack.c.b16 %v166, %v165
    %v178 = vpack.c.b16 %v168, %v167
    %v179 = vpack.c.b16 %v170, %v169
    %v180 = vpack.c.b16 %v172, %v171
    %189 = vmatprep.subr.bf16.mxu0 0
    %190 = vmatpush1.bf16.msra.mxu0 %v173
    %191 = vmatprep.subr.bf16.mxu0 0
    %192 = vmatpush1.bf16.msra.mxu0 %v174
    %193 = vmatprep.subr.bf16.mxu0 0
    %194 = vmatpush1.bf16.msra.mxu0 %v175
    %195 = vmatprep.subr.bf16.mxu0 0
    %196 = vmatpush1.bf16.msra.mxu0 %v176
    %197 = vmatprep.subr.bf16.mxu0 0
    %198 = vmatpush1.bf16.msra.mxu0 %v177
    %199 = vmatprep.subr.bf16.mxu0 0
    %200 = vmatpush1.bf16.msra.mxu0 %v178
    %201 = vmatprep.subr.bf16.mxu0 0
    %202 = vmatpush1.bf16.msra.mxu0 %v179
    %203 = vmatprep.subr.bf16.mxu0 0
    %204 = vmatpush1.bf16.msra.mxu0 %v180
    %205 = vmatprep.subr.bf16.mxu0 0
    %206 = vmatpush1.bf16.msra.mxu0 0
    %207 = vmatprep.subr.bf16.mxu0 0
    %208 = vmatpush1.bf16.msra.mxu0 0
    %209 = vmatprep.subr.bf16.mxu0 0
    %210 = vmatpush1.bf16.msra.mxu0 0
    %211 = vmatprep.subr.bf16.mxu0 0
    %212 = vmatpush1.bf16.msra.mxu0 0
    %213 = vmatprep.subr.bf16.mxu0 0
    %214 = vmatpush1.bf16.msra.mxu0 0
    %215 = vmatprep.subr.bf16.mxu0 0
    %216 = vmatpush1.bf16.msra.mxu0 0
    %217 = vmatprep.subr.bf16.mxu0 0
    %218 = vmatpush1.bf16.msra.mxu0 0
    %219 = vmatprep.subr.bf16.mxu0 0
    %220 = vmatpush1.bf16.msra.mxu0 0
    %221 = vmatprep.mubr.bf16.mxu0 0
    %222 = vmatmul.mubr.bf16.gmra.mrb[0].mxu0 %v117
    %v223 = vpop.f32.mrb[0].mxu0
    %v224 = vadd.f32 %v139, %v223
    %v225 = vpop.f32.mrb[0].mxu0
    %v226 = vpop.f32.mrb[0].mxu0
    %v227 = vpop.f32.mrb[0].mxu0
    %228 = vdwg.mxu0
    %v229 = vmax.f32 %v224, 0.0
    %v230 = vpack.c.bf16 %v229, %v229
    %v231 = vld [vmem:[#allocation4] sm:$0xf]
    %v232 = vld [vmem:[#allocation4 + $0x4] sm:$0xf]
    %v233 = vld [vmem:[#allocation4 + $0x8] sm:$0xf]
    %v234 = vld [vmem:[#allocation4 + $0xc] sm:$0xf]
    %v235 = vld [vmem:[#allocation4 + $0x10] sm:$0xf]
    %v236 = vld [vmem:[#allocation4 + $0x14] sm:$0xf]
    %v237 = vld [vmem:[#allocation4 + $0x18] sm:$0xf]
    %v238 = vld [vmem:[#allocation4 + $0x1c] sm:$0xf]
    %v239 = vld [vmem:[#allocation4 + $0x20] sm:$0xf]
    %v240 = vld [vmem:[#allocation4 + $0x24] sm:$0xf]
    %v241 = vld [vmem:[#allocation4 + $0x28] sm:$0xf]
    %v242 = vld [vmem:[#allocation4 + $0x2c] sm:$0xf]
    %v243 = vld [vmem:[#allocation4 + $0x30] sm:$0xf]
    %v244 = vld [vmem:[#allocation4 + $0x34] sm:$0xf]
    %v245 = vld [vmem:[#allocation4 + $0x38] sm:$0xf]
    %v246 = vld [vmem:[#allocation4 + $0x3c] sm:$0xf]
    %v247 = vld [vmem:[%s6] sm:$0x1]
    %v249 = vlaneseq
    %v250 = vshrl.u32 %v249, 7
    %v251 = vsub.s32 0, %v250
    %v252 = vrot.slane %v247, %v251
    %v270 = vunpack.c.l.b16 %v231
    %v271 = vunpack.c.l.b16 %v232
    %v272 = vunpack.c.l.b16 %v233
    %v273 = vunpack.c.l.b16 %v234
    %v274 = vunpack.c.l.b16 %v235
    %v275 = vunpack.c.l.b16 %v236
    %v276 = vunpack.c.l.b16 %v237
    %v277 = vunpack.c.l.b16 %v238
    %v278 = vunpack.c.l.b16 %v239
    %v279 = vunpack.c.l.b16 %v240
    %v280 = vunpack.c.l.b16 %v241
    %v281 = vunpack.c.l.b16 %v242
    %v282 = vunpack.c.l.b16 %v243
    %v283 = vunpack.c.l.b16 %v244
    %v284 = vunpack.c.l.b16 %v245
    %v285 = vunpack.c.l.b16 %v246
    %v286 = vpack.c.b16 %v271, %v270
    %v287 = vpack.c.b16 %v273, %v272
    %v288 = vpack.c.b16 %v275, %v274
    %v289 = vpack.c.b16 %v277, %v276
    %v290 = vpack.c.b16 %v279, %v278
    %v291 = vpack.c.b16 %v281, %v280
    %v292 = vpack.c.b16 %v283, %v282
    %v293 = vpack.c.b16 %v285, %v284
    %302 = vmatprep.subr.bf16.mxu0 0
    %303 = vmatpush1.bf16.msra.mxu0 %v286
    %304 = vmatprep.subr.bf16.mxu0 0
    %305 = vmatpush1.bf16.msra.mxu0 %v287
    %306 = vmatprep.subr.bf16.mxu0 0
    %307 = vmatpush1.bf16.msra.mxu0 %v288
    %308 = vmatprep.subr.bf16.mxu0 0
    %309 = vmatpush1.bf16.msra.mxu0 %v289
    %310 = vmatprep.subr.bf16.mxu0 0
    %311 = vmatpush1.bf16.msra.mxu0 %v290
    %312 = vmatprep.subr.bf16.mxu0 0
    %313 = vmatpush1.bf16.msra.mxu0 %v291
    %314 = vmatprep.subr.bf16.mxu0 0
    %315 = vmatpush1.bf16.msra.mxu0 %v292
    %316 = vmatprep.subr.bf16.mxu0 0
    %317 = vmatpush1.bf16.msra.mxu0 %v293
    %318 = vmatprep.subr.bf16.mxu0 0
    %319 = vmatpush1.bf16.msra.mxu0 0
    %320 = vmatprep.subr.bf16.mxu0 0
    %321 = vmatpush1.bf16.msra.mxu0 0
    %322 = vmatprep.subr.bf16.mxu0 0
    %323 = vmatpush1.bf16.msra.mxu0 0
    %324 = vmatprep.subr.bf16.mxu0 0
    %325 = vmatpush1.bf16.msra.mxu0 0
    %326 = vmatprep.subr.bf16.mxu0 0
    %327 = vmatpush1.bf16.msra.mxu0 0
    %328 = vmatprep.subr.bf16.mxu0 0
    %329 = vmatpush1.bf16.msra.mxu0 0
    %330 = vmatprep.subr.bf16.mxu0 0
    %331 = vmatpush1.bf16.msra.mxu0 0
    %332 = vmatprep.subr.bf16.mxu0 0
    %333 = vmatpush1.bf16.msra.mxu0 0
    %334 = vmatprep.mubr.bf16.mxu0 0
    %335 = vmatmul.mubr.bf16.gmra.mrb[0].mxu0 %v230
    %v336 = vpop.f32.mrb[0].mxu0
    %v337 = vadd.f32 %v252, %v336
    %v338 = vpop.f32.mrb[0].mxu0
    %v339 = vpop.f32.mrb[0].mxu0
    %v340 = vpop.f32.mrb[0].mxu0
    %341 = vdwg.mxu0
    %342 = vmax.xlane.f32.xlu0 %v337
    %v343 = vpop.xlane.xlu0 %342
    %v344 = vsub.f32 %v337, %v343
    %v345 = vmul.f32 %v344, 1.442695
    %v346 = vpow.pop %v345
    %347 = vadd.xlane.f32.xlu0 %v346
    %v348 = vpop.xlane.xlu0 %347
    %v349 = vrcp.pop %v348
    %v350 = vmul.f32 %v346, %v349
    %vm351 = vcmask 64512
    %352 = vst.msk [vmem:[%s7] sm:$0xff] %vm351, %v350
    // Predicated region
    $region38: #{_actor_forward_impl.1} parent=1 // pred_check
      _
    $region39: #{_actor_forward_impl.1} parent=1 // pred_check_branch
      %354 = sbr.rel (0) target = $region41
    $region40: #{_actor_forward_impl.1} parent=1 // pred_region
      _
    $region41: #{_actor_forward_impl.1} parent=1 // pred_fallthru
      _
    // Predicated region
    $region42: #{_actor_forward_impl.1} parent=1 // pred_check
      _
    $region43: #{_actor_forward_impl.1} parent=1 // pred_check_branch
      %356 = sbr.rel (0) target = $region45
    $region44: #{_actor_forward_impl.1} parent=1 // pred_region
      _
    $region45: #{_actor_forward_impl.1} parent=1 // pred_fallthru
      _
    %357 = vsyncpa [#allocation3], 1
    %358 = vsyncpa [#allocation5], 1

</llo_original>
